<compile_context>
chip_gen: v7x
topology: tpu7x:2x2x1
jax: 0.10.0
libtpu: 0.0.40
codegen_flags: <defaults>
</compile_context>

<pallas_src>
import functools

import jax
import jax.numpy as jnp
from jax.experimental import pallas as pl
from jax.experimental.pallas import tpu as pltpu


def _mynet_kernel(lhs_ref, wconv_ref, gamma_ref, beta_ref, pool_ref, bcast_ref,
                  wlin_ref, blin_ref, o_ref, *, n_samples):
    # lhs_ref:   (N*OH, OW*KH*KW*C)  im2col rows keyed by (n, oh); cols ordered (ow, kh, kw, c)
    # wconv_ref: (OW*KH*KW*C, OW*O)  block-diagonal conv weight (delta over ow)
    # gamma_ref: (1, O), beta_ref: (1, O)   BN affine params
    # pool_ref:  (OW*O, O)   P[(ow,o), o'] = delta(o,o')    column -> channel pooling
    # bcast_ref: (O, OW*O)   P^T                            channel -> column broadcast
    # wlin_ref:  (OW*O, O*LOUT)  block-diagonal linear weight
    # blin_ref:  (1, O*LOUT)     linear bias tiled per channel
    # o_ref:     (N*OH, O*LOUT)  rows (n, oh), columns (channel, lout)
    f32 = jnp.float32

    # --- Conv2d(5,5,3), valid, stride 1: single im2col matmul (conv bias dropped,
    #     it is a no-op under training-mode BatchNorm) ---
    acc = jnp.dot(lhs_ref[...], wconv_ref[...],
                  preferred_element_type=f32)                       # (N*OH, OW*O)

    # --- BatchNorm2d (training-mode batch stats, biased var, eps=1e-5) ---
    # Row sums on the MXU (ones-row matmul), then pool (ow,o)->o columns via P.
    ones_row = jnp.ones((1, acc.shape[0]), f32)
    col_s = jnp.dot(ones_row, acc, preferred_element_type=f32)      # (1, OW*O)
    col_ss = jnp.dot(ones_row, acc * acc, preferred_element_type=f32)
    inv_n = 1.0 / float(n_samples)
    ch_mean = jnp.dot(col_s, pool_ref[...], preferred_element_type=f32) * inv_n   # (1, O)
    ch_msq = jnp.dot(col_ss, pool_ref[...], preferred_element_type=f32) * inv_n
    ch_var = ch_msq - ch_mean * ch_mean                             # E[x^2] - E[x]^2
    inv_std = jax.lax.rsqrt(ch_var + 1e-5)                          # (1, O)
    scale_ch = gamma_ref[...] * inv_std                             # (1, O)
    shift_ch = beta_ref[...] - ch_mean * scale_ch                   # (1, O)
    scale_cols = jnp.dot(scale_ch, bcast_ref[...], preferred_element_type=f32)    # (1, OW*O)
    shift_cols = jnp.dot(shift_ch, bcast_ref[...], preferred_element_type=f32)
    y = acc * scale_cols + shift_cols                               # (N*OH, OW*O)

    # --- Linear(5, 2) over the spatial-W axis via block-diagonal weight ---
    o_ref[...] = jnp.dot(y, wlin_ref[...], preferred_element_type=f32) + blin_ref[...]


def mynet_forward(x, params):
    """x: (N, C, H, W) float32 NCHW (PyTorch layout).  Returns (N, C, H-2, 2)."""
    conv_w, conv_b, gamma, beta, lin_w, lin_b = params
    del conv_b  # provably a no-op under training-mode BatchNorm (mean subtraction)
    N, C, H, W = x.shape
    O, _, KH, KW = conv_w.shape
    OH, OW = H - KH + 1, W - KW + 1
    LOUT, lin_in = lin_w.shape
    assert lin_in == OW, "Linear in_features must match conv output width"
    f32 = jnp.float32
    T = KH * KW * C

    # --- im2col LHS: rows (n, oh), columns (ow, kh, kw, c) -> (N*OH, OW*T) ---
    x_nhwc = jnp.transpose(x, (0, 2, 3, 1))                          # NCHW -> NHWC
    patches = [x_nhwc[:, kh:kh + OH, kw:kw + OW, :]
               for kh in range(KH) for kw in range(KW)]              # each (N, OH, OW, C)
    lhs = jnp.stack(patches, axis=3).reshape(N * OH, OW * T).astype(f32)

    # --- input-independent weight-side constants ---
    # per-tap conv weight, rows ordered (kh, kw, c)
    w_taps = jnp.transpose(conv_w, (2, 3, 1, 0)).reshape(T, O).astype(f32)
    eye_ow = jnp.eye(OW, dtype=f32)
    # Wconv_blk[(ow', kh, kw, c), (ow, o)] = conv_w[o,c,kh,kw] * delta(ow', ow)
    wconv_blk = jnp.einsum('pq,to->ptqo', eye_ow, w_taps).reshape(OW * T, OW * O)
    eye_o = jnp.eye(O, dtype=f32)
    pool = jnp.tile(eye_o, (OW, 1))                                  # (OW*O, O)
    bcast = jnp.transpose(pool)                                      # (O, OW*O)
    # Wlin_blk[(ow, o'), (o, l)] = lin_w[l, ow] * delta(o, o')
    wlin_blk = jnp.einsum('lw,po->wpol', lin_w.astype(f32), eye_o).reshape(OW * O, O * LOUT)
    blin_cols = jnp.tile(lin_b.astype(f32), O).reshape(1, O * LOUT)  # [(o, l)] -> lin_b[l]

    kernel = functools.partial(_mynet_kernel, n_samples=N * OH * OW)
    out2 = pl.pallas_call(
        kernel,
        out_shape=jax.ShapeDtypeStruct((N * OH, O * LOUT), f32),
        in_specs=[pl.BlockSpec(memory_space=pltpu.MemorySpace.VMEM)] * 8,
        out_specs=pl.BlockSpec(memory_space=pltpu.MemorySpace.VMEM),
    )(lhs, wconv_blk,
      gamma.reshape(1, O).astype(f32), beta.reshape(1, O).astype(f32),
      pool, bcast, wlin_blk, blin_cols)

    # rows were (n, oh), columns (c, l)  ->  PyTorch layout (N, C, OH, LOUT)
    return out2.reshape(N, OH, O, LOUT).transpose(0, 2, 1, 3)


def ref_forward(x, params):
    """Pure-JAX reference with identical semantics (for verification)."""
    conv_w, conv_b, gamma, beta, lin_w, lin_b = params
    y = jax.lax.conv_general_dilated(
        x, conv_w, window_strides=(1, 1), padding="VALID",
        dimension_numbers=("NCHW", "OIHW", "NCHW"))
    y = y + conv_b[None, :, None, None]
    m = y.mean(axis=(0, 2, 3), keepdims=True)
    v = ((y - m) ** 2).mean(axis=(0, 2, 3), keepdims=True)
    y = (y - m) / jnp.sqrt(v + 1e-5)
    y = y * gamma[None, :, None, None] + beta[None, :, None, None]
    z = jnp.einsum("nchw,ow->ncho", y, lin_w) + lin_b
    return z


if __name__ == "__main__":
    key = jax.random.PRNGKey(0)
    kx, kw1, kb1, kw2, kb2 = jax.random.split(key, 5)

    # Deterministic synthetic parameters (shapes from the module's __init__).
    conv_w = jax.random.normal(kw1, (5, 5, 3, 3), jnp.float32) * 0.1   # Conv2d(5,5,3)
    conv_b = jax.random.normal(kb1, (5,), jnp.float32) * 0.1
    gamma = jnp.ones((5,), jnp.float32)                                 # BatchNorm2d(5)
    beta = jnp.zeros((5,), jnp.float32)
    lin_w = jax.random.normal(kw2, (2, 5), jnp.float32) * 0.1           # Linear(5,2)
    lin_b = jax.random.normal(kb2, (2,), jnp.float32) * 0.1
    params = (conv_w, conv_b, gamma, beta, lin_w, lin_b)

    # Input: width must be 7 so Linear(5,2) is valid after the 3x3 conv.
    x = jax.random.normal(kx, (2, 5, 9, 7), jnp.float32)

    fwd = jax.jit(mynet_forward)   # fuse the tiny wrapper-side XLA ops around the call
    out = jax.block_until_ready(fwd(x, params))

    ref = ref_forward(x, params)
    assert out.shape == (2, 5, 7, 2), out.shape
    assert jnp.allclose(out, ref, atol=1e-3, rtol=1e-3), float(jnp.abs(out - ref).max())

    # TODO(synk): the PyTorch forward() has no return statement (returns None);
    # here we return the last layer's activation instead.
    print("KERNEL_OK")
</pallas_src>

<mosaic_0001>
module attributes {stable_mosaic.version = 11 : i64} {
  func.func @_mynet_kernel(%arg0: memref<14x225xf32, #tpu.memory_space<vmem>>, %arg1: memref<225x25xf32, #tpu.memory_space<vmem>>, %arg2: memref<1x5xf32, #tpu.memory_space<vmem>>, %arg3: memref<1x5xf32, #tpu.memory_space<vmem>>, %arg4: memref<25x5xf32, #tpu.memory_space<vmem>>, %arg5: memref<5x25xf32, #tpu.memory_space<vmem>>, %arg6: memref<25x10xf32, #tpu.memory_space<vmem>>, %arg7: memref<1x10xf32, #tpu.memory_space<vmem>>, %arg8: memref<14x10xf32, #tpu.memory_space<vmem>>) attributes {dimension_semantics = [], scalar_prefetch = 0 : i64, scratch_operands = 0 : i64, tpu.core_type = #tpu.core_type<tc>} {
    %c0 = arith.constant 0 : index
    %c0_0 = arith.constant 0 : index
    %0 = vector.load %arg0[%c0, %c0_0] : memref<14x225xf32, #tpu.memory_space<vmem>>, vector<14x225xf32>
    %c0_1 = arith.constant 0 : index
    %c0_2 = arith.constant 0 : index
    %1 = vector.load %arg1[%c0_1, %c0_2] : memref<225x25xf32, #tpu.memory_space<vmem>>, vector<225x25xf32>
    %cst = arith.constant dense<0.000000e+00> : vector<14x25xf32>
    %2 = tpu.matmul %0, %1, %cst {dimension_numbers = #tpu.dot_dimension_numbers<[1], [0], [0], [1], [0, 0, 1, 1], [], []>} : vector<14x225xf32>, vector<225x25xf32>, vector<14x25xf32> -> vector<14x25xf32>
    %cst_3 = arith.constant 1.000000e+00 : f32
    %3 = vector.broadcast %cst_3 : f32 to vector<1x14xf32>
    %cst_4 = arith.constant dense<0.000000e+00> : vector<1x25xf32>
    %4 = tpu.matmul %3, %2, %cst_4 {dimension_numbers = #tpu.dot_dimension_numbers<[1], [0], [0], [1], [0, 0, 1, 1], [], []>} : vector<1x14xf32>, vector<14x25xf32>, vector<1x25xf32> -> vector<1x25xf32>
    %5 = arith.mulf %2, %2 : vector<14x25xf32>
    %cst_5 = arith.constant dense<0.000000e+00> : vector<1x25xf32>
    %6 = tpu.matmul %3, %5, %cst_5 {dimension_numbers = #tpu.dot_dimension_numbers<[1], [0], [0], [1], [0, 0, 1, 1], [], []>} : vector<1x14xf32>, vector<14x25xf32>, vector<1x25xf32> -> vector<1x25xf32>
    %c0_6 = arith.constant 0 : index
    %c0_7 = arith.constant 0 : index
    %7 = vector.load %arg4[%c0_6, %c0_7] : memref<25x5xf32, #tpu.memory_space<vmem>>, vector<25x5xf32>
    %cst_8 = arith.constant dense<0.000000e+00> : vector<1x5xf32>
    %8 = tpu.matmul %4, %7, %cst_8 {dimension_numbers = #tpu.dot_dimension_numbers<[1], [0], [0], [1], [0, 0, 1, 1], [], []>} : vector<1x25xf32>, vector<25x5xf32>, vector<1x5xf32> -> vector<1x5xf32>
    %cst_9 = arith.constant 0.0142857144 : f32
    %9 = vector.broadcast %cst_9 : f32 to vector<1x5xf32>
    %10 = arith.mulf %8, %9 : vector<1x5xf32>
    %c0_10 = arith.constant 0 : index
    %c0_11 = arith.constant 0 : index
    %11 = vector.load %arg4[%c0_10, %c0_11] : memref<25x5xf32, #tpu.memory_space<vmem>>, vector<25x5xf32>
    %cst_12 = arith.constant dense<0.000000e+00> : vector<1x5xf32>
    %12 = tpu.matmul %6, %11, %cst_12 {dimension_numbers = #tpu.dot_dimension_numbers<[1], [0], [0], [1], [0, 0, 1, 1], [], []>} : vector<1x25xf32>, vector<25x5xf32>, vector<1x5xf32> -> vector<1x5xf32>
    %cst_13 = arith.constant 0.0142857144 : f32
    %13 = vector.broadcast %cst_13 : f32 to vector<1x5xf32>
    %14 = arith.mulf %12, %13 : vector<1x5xf32>
    %15 = arith.mulf %10, %10 : vector<1x5xf32>
    %16 = arith.subf %14, %15 : vector<1x5xf32>
    %cst_14 = arith.constant 9.99999974E-6 : f32
    %17 = vector.broadcast %cst_14 : f32 to vector<1x5xf32>
    %18 = arith.addf %16, %17 : vector<1x5xf32>
    %19 = math.rsqrt %18 : vector<1x5xf32>
    %c0_15 = arith.constant 0 : index
    %c0_16 = arith.constant 0 : index
    %20 = vector.load %arg2[%c0_15, %c0_16] : memref<1x5xf32, #tpu.memory_space<vmem>>, vector<1x5xf32>
    %21 = arith.mulf %20, %19 : vector<1x5xf32>
    %c0_17 = arith.constant 0 : index
    %c0_18 = arith.constant 0 : index
    %22 = vector.load %arg3[%c0_17, %c0_18] : memref<1x5xf32, #tpu.memory_space<vmem>>, vector<1x5xf32>
    %23 = arith.mulf %10, %21 : vector<1x5xf32>
    %24 = arith.subf %22, %23 : vector<1x5xf32>
    %c0_19 = arith.constant 0 : index
    %c0_20 = arith.constant 0 : index
    %25 = vector.load %arg5[%c0_19, %c0_20] : memref<5x25xf32, #tpu.memory_space<vmem>>, vector<5x25xf32>
    %cst_21 = arith.constant dense<0.000000e+00> : vector<1x25xf32>
    %26 = tpu.matmul %21, %25, %cst_21 {dimension_numbers = #tpu.dot_dimension_numbers<[1], [0], [0], [1], [0, 0, 1, 1], [], []>} : vector<1x5xf32>, vector<5x25xf32>, vector<1x25xf32> -> vector<1x25xf32>
    %c0_22 = arith.constant 0 : index
    %c0_23 = arith.constant 0 : index
    %27 = vector.load %arg5[%c0_22, %c0_23] : memref<5x25xf32, #tpu.memory_space<vmem>>, vector<5x25xf32>
    %cst_24 = arith.constant dense<0.000000e+00> : vector<1x25xf32>
    %28 = tpu.matmul %24, %27, %cst_24 {dimension_numbers = #tpu.dot_dimension_numbers<[1], [0], [0], [1], [0, 0, 1, 1], [], []>} : vector<1x5xf32>, vector<5x25xf32>, vector<1x25xf32> -> vector<1x25xf32>
    %29 = vector.broadcast %26 : vector<1x25xf32> to vector<14x25xf32>
    %30 = arith.mulf %2, %29 : vector<14x25xf32>
    %31 = vector.broadcast %28 : vector<1x25xf32> to vector<14x25xf32>
    %32 = arith.addf %30, %31 : vector<14x25xf32>
    %c0_25 = arith.constant 0 : index
    %c0_26 = arith.constant 0 : index
    %33 = vector.load %arg6[%c0_25, %c0_26] : memref<25x10xf32, #tpu.memory_space<vmem>>, vector<25x10xf32>
    %cst_27 = arith.constant dense<0.000000e+00> : vector<14x10xf32>
    %34 = tpu.matmul %32, %33, %cst_27 {dimension_numbers = #tpu.dot_dimension_numbers<[1], [0], [0], [1], [0, 0, 1, 1], [], []>} : vector<14x25xf32>, vector<25x10xf32>, vector<14x10xf32> -> vector<14x10xf32>
    %c0_28 = arith.constant 0 : index
    %c0_29 = arith.constant 0 : index
    %35 = vector.load %arg7[%c0_28, %c0_29] : memref<1x10xf32, #tpu.memory_space<vmem>>, vector<1x10xf32>
    %36 = vector.broadcast %35 : vector<1x10xf32> to vector<14x10xf32>
    %37 = arith.addf %34, %36 : vector<14x10xf32>
    %c0_30 = arith.constant 0 : index
    %c0_31 = arith.constant 0 : index
    %38 = vector.load %arg8[%c0_30, %c0_31] : memref<14x10xf32, #tpu.memory_space<vmem>>, vector<14x10xf32>
    tpu.vector_store %arg8[%c0_30, %c0_31], %37 {strides = array<i32>} : memref<14x10xf32, #tpu.memory_space<vmem>>, vector<14x10xf32>,
    return
  }
}

</mosaic_0001>

<llo_original>
// kernel: tile.14
$region0: #{tile.14}
  %s0 = inlined_call_operand.vmem [shape: f32[5,5,5], index: 0, kind: input, shape index: {}]
  %s1 = inlined_call_operand.vmem [shape: f32[25,5], index: 1, kind: output, shape index: {}]
  %v2 = vld [vmem:[%s0] ss:$8 sm:$0xf]
  %s3 = scalar_lea.vmem %s0, 28
  %v4 = vld [vmem:[%s3] sm:$0x10]
  %vm5 = vcmask 1044484
  %v6 = vsel %vm5, %v4, %v2
  %vm7 = vcmask 39936
  %8 = vst.msk [vmem:[%s1] sm:$0x1f] %vm7, %v6
  %s9 = scalar_lea.vmem %s0, 4
  %v10 = vld [vmem:[%s9] ss:$8 sm:$0xf]
  %s11 = scalar_lea.vmem %s0, 32
  %v12 = vld [vmem:[%s11] sm:$0x10]
  %vm13 = vcmask 1044484
  %v14 = vsel %vm13, %v12, %v10
  %15 = vrot.lane.b32.xlu0 %v14, 20
  %v16 = vpop.permute.xlu0 %15
  %vm17 = vcmask 203936
  %18 = vst.msk [vmem:[%s1] sm:$0x1f] %vm17, %v16
  %s19 = scalar_lea.vmem %s0, 3
  %v20 = vld [vmem:[%s19] ss:$8 sm:$0xf]
  %s21 = scalar_lea.vmem %s0, 31
  %v22 = vld [vmem:[%s21] sm:$0x10]
  %vm23 = vcmask 1044484
  %v24 = vsel %vm23, %v22, %v20
  %25 = vrot.lane.b32.xlu0 %v24, 15
  %v26 = vpop.permute.xlu0 %25
  %vm27 = vcmask 162936
  %28 = vst.msk [vmem:[%s1] sm:$0x1f] %vm27, %v26
  %s29 = scalar_lea.vmem %s0, 2
  %v30 = vld [vmem:[%s29] ss:$8 sm:$0xf]
  %s31 = scalar_lea.vmem %s0, 30
  %v32 = vld [vmem:[%s31] sm:$0x10]
  %vm33 = vcmask 1044484
  %v34 = vsel %vm33, %v32, %v30
  %35 = vrot.lane.b32.xlu0 %v34, 10
  %v36 = vpop.permute.xlu0 %35
  %vm37 = vcmask 121936
  %38 = vst.msk [vmem:[%s1] sm:$0x1f] %vm37, %v36
  %s39 = scalar_lea.vmem %s0, 1
  %v40 = vld [vmem:[%s39] ss:$8 sm:$0xf]
  %s41 = scalar_lea.vmem %s0, 29
  %v42 = vld [vmem:[%s41] sm:$0x10]
  %vm43 = vcmask 1044484
  %v44 = vsel %vm43, %v42, %v40
  %45 = vrot.lane.b32.xlu0 %v44, 5
  %v46 = vpop.permute.xlu0 %45
  %vm47 = vcmask 80936
  %48 = vst.msk [vmem:[%s1] sm:$0x1f] %vm47, %v46

// kernel: tile.18
$region0: #{tile.18}
  #allocation0 [shape = 's32[1]{0}', space=sflag, size = 0x4, scoped, tag = 'scoped memory for tile.18']
  %s0 = inlined_call_operand.vmem [shape: f32[2], index: 0, kind: input, shape index: {}]
  %s1 = inlined_call_operand.vmem [shape: f32[5,2], index: 1, kind: output, shape index: {}]
  // Predicated region
  $region2: #{tile.18} parent=0 // pred_check
    _
  $region3: #{tile.18} parent=0 // pred_check_branch
    %3 = sbr.rel (0) target = $region5
  $region4: #{tile.18} parent=0 // pred_region
    _
  $region5: #{tile.18} parent=0 // pred_fallthru
    _
  %v4 = vld [vmem:[%s0] ss:$0 sm:$0xff]
  %5 = vst [vmem:[%s1] sm:$0xff] %v4

// kernel: tile.19
$region0: #{tile.19}
  %s0 = inlined_call_operand.vmem [shape: f32[5,2], index: 0, kind: input, shape index: {}]
  %s1 = inlined_call_operand.vmem [shape: f32[1,10], index: 1, kind: output, shape index: {}]
  $region1: #{tile.19} parent=0
    #allocation0 [shape = 'u8[4096]{0}', space=vmem, size = 0x1000, scoped, tag = 'scoped mem for output reshape']
    %v2 = vld [vmem:[%s0] sm:$0x1]
    %vm3 = vcmask 15360
    %4 = vst.msk [vmem:[#allocation0] sm:$0x1] %vm3, %v2
    %s5 = scalar_lea.vmem %s0, 4
    %v6 = vld [vmem:[%s5] sm:$0x1]
    %7 = vrot.lane.b32.xlu0 %v6, 8
    %v8 = vpop.permute.xlu0 %7
    %vm9 = vcmask 80960
    %10 = vst.msk [vmem:[#allocation0] sm:$0x1] %vm9, %v8
    %s11 = scalar_lea.vmem %s0, 3
    %v12 = vld [vmem:[%s11] sm:$0x1]
    %13 = vrot.lane.b32.xlu0 %v12, 6
    %v14 = vpop.permute.xlu0 %13
    %vm15 = vcmask 64560
    %16 = vst.msk [vmem:[#allocation0] sm:$0x1] %vm15, %v14
    %s17 = scalar_lea.vmem %s0, 2
    %v18 = vld [vmem:[%s17] sm:$0x1]
    %19 = vrot.lane.b32.xlu0 %v18, 4
    %v20 = vpop.permute.xlu0 %19
    %vm21 = vcmask 48160
    %22 = vst.msk [vmem:[#allocation0] sm:$0x1] %vm21, %v20
    %s23 = scalar_lea.vmem %s0, 1
    %v24 = vld [vmem:[%s23] sm:$0x1]
    %25 = vrot.lane.b32.xlu0 %v24, 2
    %v26 = vpop.permute.xlu0 %25
    %vm27 = vcmask 31760
    %28 = vst.msk [vmem:[#allocation0] sm:$0x1] %vm27, %v26
    %s30 = sshllo.u32 0, 1
    %v32 = vld [vmem:[#allocation0] sm:%s30]
    %s33 = sshllo.u32 0, 1
    %34 = vst [vmem:[%s1] sm:%s33] %v32

// kernel: mynet_forward.1
$region0: #{mynet_forward.1}
  #allocation0 [shape = 'u32[]', space=smem, size = 0x4, offset = 0x4, fixed_abs, tag = 'smem constant byte address 0x4 - core index']
  #allocation1 [shape = 'u32[144,128]{1,0:T(1,128)}', space=vmem, size = 0x12000, scoped, tag = 'internal scratch']
  %s0 = inlined_call_operand.vmem [shape: f32[14,225], index: 0, kind: input, shape index: {}]
  %s1 = inlined_call_operand.vmem [shape: f32[225,25], index: 1, kind: input, shape index: {}]
  %s2 = inlined_call_operand.vmem [shape: f32[1,5], index: 2, kind: input, shape index: {}]
  %s3 = inlined_call_operand.vmem [shape: f32[1,5], index: 3, kind: input, shape index: {}]
  %s4 = inlined_call_operand.vmem [shape: f32[25,5], index: 4, kind: input, shape index: {}]
  %s5 = inlined_call_operand.vmem [shape: f32[5,25], index: 5, kind: input, shape index: {}]
  %s6 = inlined_call_operand.vmem [shape: f32[25,10], index: 6, kind: input, shape index: {}]
  %s7 = inlined_call_operand.vmem [shape: f32[1,10], index: 7, kind: input, shape index: {}]
  %s8 = inlined_call_operand.vmem [shape: f32[14,10], index: 8, kind: output, shape index: {}]
  %s9 = sld [smem:[#allocation0]]
  $region42: #{mynet_forward.1} parent=0
    _
  %s11 = ssub.s32 1, %s9
  %s12 = scalar_select 0, %s11, %s9
  // Predicated region
  $region2: #{mynet_forward.1} parent=0 // pred_check
    _
  $region3: #{mynet_forward.1} parent=0 // pred_check_branch
    %14 = sbr.rel (0) target = $region5
  $region4: #{mynet_forward.1} parent=0 // pred_region
    _
  $region5: #{mynet_forward.1} parent=0 // pred_fallthru
    _
  // Predicated region
  $region6: #{mynet_forward.1} parent=0 // pred_check
    _
  $region7: #{mynet_forward.1} parent=0 // pred_check_branch
    %16 = sbr.rel (0) target = $region9
  $region8: #{mynet_forward.1} parent=0 // pred_region
    _
  $region9: #{mynet_forward.1} parent=0 // pred_fallthru
    _
  // Predicated region
  $region10: #{mynet_forward.1} parent=0 // pred_check
    _
  $region11: #{mynet_forward.1} parent=0 // pred_check_branch
    %18 = sbr.rel (0) target = $region13
  $region12: #{mynet_forward.1} parent=0 // pred_region
    _
  $region13: #{mynet_forward.1} parent=0 // pred_fallthru
    _
  // Predicated region
  $region14: #{mynet_forward.1} parent=0 // pred_check
    _
  $region15: #{mynet_forward.1} parent=0 // pred_check_branch
    %20 = sbr.rel (0) target = $region17
  $region16: #{mynet_forward.1} parent=0 // pred_region
    _
  $region17: #{mynet_forward.1} parent=0 // pred_fallthru
    _
  // Predicated region
  $region18: #{mynet_forward.1} parent=0 // pred_check
    _
  $region19: #{mynet_forward.1} parent=0 // pred_check_branch
    %22 = sbr.rel (0) target = $region21
  $region20: #{mynet_forward.1} parent=0 // pred_region
    _
  $region21: #{mynet_forward.1} parent=0 // pred_fallthru
    _
  // Predicated region
  $region22: #{mynet_forward.1} parent=0 // pred_check
    _
  $region23: #{mynet_forward.1} parent=0 // pred_check_branch
    %24 = sbr.rel (0) target = $region25
  $region24: #{mynet_forward.1} parent=0 // pred_region
    _
  $region25: #{mynet_forward.1} parent=0 // pred_fallthru
    _
  // Predicated region
  $region26: #{mynet_forward.1} parent=0 // pred_check
    _
  $region27: #{mynet_forward.1} parent=0 // pred_check_branch
    %26 = sbr.rel (0) target = $region29
  $region28: #{mynet_forward.1} parent=0 // pred_region
    _
  $region29: #{mynet_forward.1} parent=0 // pred_fallthru
    _
  // Predicated region
  $region30: #{mynet_forward.1} parent=0 // pred_check
    _
  $region31: #{mynet_forward.1} parent=0 // pred_check_branch
    %28 = sbr.rel (0) target = $region33
  $region32: #{mynet_forward.1} parent=0 // pred_region
    _
  $region33: #{mynet_forward.1} parent=0 // pred_fallthru
    _
  %v29 = vld [vmem:[%s0] sm:$0xff]
  %v30 = vld [vmem:[%s0 + $0x8] sm:$0xff]
  %v31 = vld [vmem:[%s0 + $0x10] sm:$0x3f]
  %v32 = vld [vmem:[%s0 + $0x18] sm:$0x3f]
  %v33 = vld [vmem:[%s1] sm:$0xff]
  %v34 = vld [vmem:[%s1 + $0x8] sm:$0xff]
  %v35 = vld [vmem:[%s1 + $0x10] sm:$0xff]
  %v36 = vld [vmem:[%s1 + $0x18] sm:$0xff]
  %v37 = vld [vmem:[%s1 + $0x20] sm:$0xff]
  %v38 = vld [vmem:[%s1 + $0x28] sm:$0xff]
  %v39 = vld [vmem:[%s1 + $0x30] sm:$0xff]
  %v40 = vld [vmem:[%s1 + $0x38] sm:$0xff]
  %v41 = vld [vmem:[%s1 + $0x40] sm:$0xff]
  %v42 = vld [vmem:[%s1 + $0x48] sm:$0xff]
  %v43 = vld [vmem:[%s1 + $0x50] sm:$0xff]
  %v44 = vld [vmem:[%s1 + $0x58] sm:$0xff]
  %v45 = vld [vmem:[%s1 + $0x60] sm:$0xff]
  %v46 = vld [vmem:[%s1 + $0x68] sm:$0xff]
  %v47 = vld [vmem:[%s1 + $0x70] sm:$0xff]
  %v48 = vld [vmem:[%s1 + $0x78] sm:$0xff]
  %v49 = vld [vmem:[%s1 + $0x80] sm:$0xff]
  %v50 = vld [vmem:[%s1 + $0x88] sm:$0xff]
  %v51 = vld [vmem:[%s1 + $0x90] sm:$0xff]
  %v52 = vld [vmem:[%s1 + $0x98] sm:$0xff]
  %v53 = vld [vmem:[%s1 + $0xa0] sm:$0xff]
  %v54 = vld [vmem:[%s1 + $0xa8] sm:$0xff]
  %v55 = vld [vmem:[%s1 + $0xb0] sm:$0xff]
  %v56 = vld [vmem:[%s1 + $0xb8] sm:$0xff]
  %v57 = vld [vmem:[%s1 + $0xc0] sm:$0xff]
  %v58 = vld [vmem:[%s1 + $0xc8] sm:$0xff]
  %v59 = vld [vmem:[%s1 + $0xd0] sm:$0xff]
  %v60 = vld [vmem:[%s1 + $0xd8] sm:$0xff]
  %v61 = vld [vmem:[%s1 + $0xe0] sm:$0x1]
  %vm62 = vcmask 793600
  %v64 = vsel %vm62, %v30, 0
  %v67 = vsel %vm62, %v32, 0
  %vm69 = vcmask 1040384
  %v71 = vsel %vm69, %v61, 0
  %73 = vmatprep.subr.mxu0 0.0
  %74 = vmatpush1.msra.mxu0 %v33
  %75 = vmatprep.subr.mxu0 0.0
  %76 = vmatpush1.msra.mxu0 %v34
  %77 = vmatprep.subr.mxu0 0.0
  %78 = vmatpush1.msra.mxu0 %v35
  %79 = vmatprep.subr.mxu0 0.0
  %80 = vmatpush1.msra.mxu0 %v36
  %81 = vmatprep.subr.mxu0 0.0
  %82 = vmatpush1.msra.mxu0 %v37
  %83 = vmatprep.subr.mxu0 0.0
  %84 = vmatpush1.msra.mxu0 %v38
  %85 = vmatprep.subr.mxu0 0.0
  %86 = vmatpush1.msra.mxu0 %v39
  %87 = vmatprep.subr.mxu0 0.0
  %88 = vmatpush1.msra.mxu0 %v40
  %89 = vmatprep.subr.mxu0 0.0
  %90 = vmatpush1.msra.mxu0 %v41
  %91 = vmatprep.subr.mxu0 0.0
  %92 = vmatpush1.msra.mxu0 %v42
  %93 = vmatprep.subr.mxu0 0.0
  %94 = vmatpush1.msra.mxu0 %v43
  %95 = vmatprep.subr.mxu0 0.0
  %96 = vmatpush1.msra.mxu0 %v44
  %97 = vmatprep.subr.mxu0 0.0
  %98 = vmatpush1.msra.mxu0 %v45
  %99 = vmatprep.subr.mxu0 0.0
  %100 = vmatpush1.msra.mxu0 %v46
  %101 = vmatprep.subr.mxu0 0.0
  %102 = vmatpush1.msra.mxu0 %v47
  %103 = vmatprep.subr.mxu0 0.0
  %104 = vmatpush1.msra.mxu0 %v48
  %105 = vmatprep.subr.mxu0 0.0
  %106 = vmatpush1.msra.mxu0 %v49
  %107 = vmatprep.subr.mxu0 0.0
  %108 = vmatpush1.msra.mxu0 %v50
  %109 = vmatprep.subr.mxu0 0.0
  %110 = vmatpush1.msra.mxu0 %v51
  %111 = vmatprep.subr.mxu0 0.0
  %112 = vmatpush1.msra.mxu0 %v52
  %113 = vmatprep.subr.mxu0 0.0
  %114 = vmatpush1.msra.mxu0 %v53
  %115 = vmatprep.subr.mxu0 0.0
  %116 = vmatpush1.msra.mxu0 %v54
  %117 = vmatprep.subr.mxu0 0.0
  %118 = vmatpush1.msra.mxu0 %v55
  %119 = vmatprep.subr.mxu0 0.0
  %120 = vmatpush1.msra.mxu0 %v56
  %121 = vmatprep.subr.mxu0 0.0
  %122 = vmatpush1.msra.mxu0 %v57
  %123 = vmatprep.subr.mxu0 0.0
  %124 = vmatpush1.msra.mxu0 %v58
  %125 = vmatprep.subr.mxu0 0.0
  %126 = vmatpush1.msra.mxu0 %v59
  %127 = vmatprep.subr.mxu0 0.0
  %128 = vmatpush1.msra.mxu0 %v60
  %129 = vmatprep.subr.mxu0 0.0
  %130 = vmatpush1.msra.mxu0 %v71
  %131 = vmatprep.subr.mxu0 0.0
  %132 = vmatpush1.msra.mxu0 0.0
  %133 = vmatprep.subr.mxu0 0.0
  %134 = vmatpush1.msra.mxu0 0.0
  %135 = vmatprep.subr.mxu0 0.0
  %136 = vmatpush1.msra.mxu0 0.0
  %137 = vmatprep.mubr.f32.mxu0 %v64
  %138 = vmatmul.mubr.f32.gmra.mrb[0].mxu0 %v29
  %v139 = vpop.f32.mrb[0].mxu0
  %v140 = vadd.f32 0.0, %v139
  %v141 = vpop.f32.mrb[0].mxu0
  %142 = vmatprep.mubr.f32.mxu0 %v67
  %143 = vmatmul.mubr.f32.gmra.mrb[0].mxu0 %v31
  %v144 = vpop.f32.mrb[0].mxu0
  %v145 = vadd.f32 0.0, %v144
  %v146 = vpop.f32.mrb[0].mxu0
  %147 = vdwg.mxu0
  %vm148 = vcmask 113664
  %v150 = vsel %vm148, 1.0, 0
  %vm152 = vcmask 1045504
  %v154 = vsel %vm152, %v145, 0
  %156 = vmatprep.subr.mxu0 0.0
  %157 = vmatpush1.msra.mxu0 %v140
  %158 = vmatprep.subr.mxu0 0.0
  %159 = vmatpush1.msra.mxu0 %v154
  %160 = vmatprep.subr.mxu0 0.0
  %161 = vmatpush1.msra.mxu0 0.0
  %162 = vmatprep.subr.mxu0 0.0
  %163 = vmatpush1.msra.mxu0 0.0
  %164 = vmatprep.subr.mxu0 0.0
  %165 = vmatpush1.msra.mxu0 0.0
  %166 = vmatprep.subr.mxu0 0.0
  %167 = vmatpush1.msra.mxu0 0.0
  %168 = vmatprep.subr.mxu0 0.0
  %169 = vmatpush1.msra.mxu0 0.0
  %170 = vmatprep.subr.mxu0 0.0
  %171 = vmatpush1.msra.mxu0 0.0
  %172 = vmatprep.subr.mxu0 0.0
  %173 = vmatpush1.msra.mxu0 0.0
  %174 = vmatprep.subr.mxu0 0.0
  %175 = vmatpush1.msra.mxu0 0.0
  %176 = vmatprep.subr.mxu0 0.0
  %177 = vmatpush1.msra.mxu0 0.0
  %178 = vmatprep.subr.mxu0 0.0
  %179 = vmatpush1.msra.mxu0 0.0
  %180 = vmatprep.subr.mxu0 0.0
  %181 = vmatpush1.msra.mxu0 0.0
  %182 = vmatprep.subr.mxu0 0.0
  %183 = vmatpush1.msra.mxu0 0.0
  %184 = vmatprep.subr.mxu0 0.0
  %185 = vmatpush1.msra.mxu0 0.0
  %186 = vmatprep.subr.mxu0 0.0
  %187 = vmatpush1.msra.mxu0 0.0
  %188 = vmatprep.subr.mxu0 0.0
  %189 = vmatpush1.msra.mxu0 0.0
  %190 = vmatprep.subr.mxu0 0.0
  %191 = vmatpush1.msra.mxu0 0.0
  %192 = vmatprep.subr.mxu0 0.0
  %193 = vmatpush1.msra.mxu0 0.0
  %194 = vmatprep.subr.mxu0 0.0
  %195 = vmatpush1.msra.mxu0 0.0
  %196 = vmatprep.subr.mxu0 0.0
  %197 = vmatpush1.msra.mxu0 0.0
  %198 = vmatprep.subr.mxu0 0.0
  %199 = vmatpush1.msra.mxu0 0.0
  %200 = vmatprep.subr.mxu0 0.0
  %201 = vmatpush1.msra.mxu0 0.0
  %202 = vmatprep.subr.mxu0 0.0
  %203 = vmatpush1.msra.mxu0 0.0
  %204 = vmatprep.subr.mxu0 0.0
  %205 = vmatpush1.msra.mxu0 0.0
  %206 = vmatprep.subr.mxu0 0.0
  %207 = vmatpush1.msra.mxu0 0.0
  %208 = vmatprep.subr.mxu0 0.0
  %209 = vmatpush1.msra.mxu0 0.0
  %210 = vmatprep.subr.mxu0 0.0
  %211 = vmatpush1.msra.mxu0 0.0
  %212 = vmatprep.subr.mxu0 0.0
  %213 = vmatpush1.msra.mxu0 0.0
  %214 = vmatprep.subr.mxu0 0.0
  %215 = vmatpush1.msra.mxu0 0.0
  %216 = vmatprep.subr.mxu0 0.0
  %217 = vmatpush1.msra.mxu0 0.0
  %218 = vmatprep.subr.mxu0 0.0
  %219 = vmatpush1.msra.mxu0 0.0
  %220 = vmatprep.mubr.f32.mxu0 0.0
  %221 = vmatmul.mubr.f32.gmra.mrb[0].mxu0 %v150
  %v222 = vpop.f32.mrb[0].mxu0
  %v223 = vadd.f32 0.0, %v222
  %v224 = vpop.f32.mrb[0].mxu0
  %225 = vdwg.mxu0
  %v226 = vmul.f32 %v140, %v140
  %v227 = vmul.f32 %v145, %v145
  %v229 = vsel %vm152, %v227, 0
  %231 = vmatprep.subr.mxu0 0.0
  %232 = vmatpush1.msra.mxu0 %v226
  %233 = vmatprep.subr.mxu0 0.0
  %234 = vmatpush1.msra.mxu0 %v229
  %235 = vmatprep.subr.mxu0 0.0
  %236 = vmatpush1.msra.mxu0 0.0
  %237 = vmatprep.subr.mxu0 0.0
  %238 = vmatpush1.msra.mxu0 0.0
  %239 = vmatprep.subr.mxu0 0.0
  %240 = vmatpush1.msra.mxu0 0.0
  %241 = vmatprep.subr.mxu0 0.0
  %242 = vmatpush1.msra.mxu0 0.0
  %243 = vmatprep.subr.mxu0 0.0
  %244 = vmatpush1.msra.mxu0 0.0
  %245 = vmatprep.subr.mxu0 0.0
  %246 = vmatpush1.msra.mxu0 0.0
  %247 = vmatprep.subr.mxu0 0.0
  %248 = vmatpush1.msra.mxu0 0.0
  %249 = vmatprep.subr.mxu0 0.0
  %250 = vmatpush1.msra.mxu0 0.0
  %251 = vmatprep.subr.mxu0 0.0
  %252 = vmatpush1.msra.mxu0 0.0
  %253 = vmatprep.subr.mxu0 0.0
  %254 = vmatpush1.msra.mxu0 0.0
  %255 = vmatprep.subr.mxu0 0.0
  %256 = vmatpush1.msra.mxu0 0.0
  %257 = vmatprep.subr.mxu0 0.0
  %258 = vmatpush1.msra.mxu0 0.0
  %259 = vmatprep.subr.mxu0 0.0
  %260 = vmatpush1.msra.mxu0 0.0
  %261 = vmatprep.subr.mxu0 0.0
  %262 = vmatpush1.msra.mxu0 0.0
  %263 = vmatprep.subr.mxu0 0.0
  %264 = vmatpush1.msra.mxu0 0.0
  %265 = vmatprep.subr.mxu0 0.0
  %266 = vmatpush1.msra.mxu0 0.0
  %267 = vmatprep.subr.mxu0 0.0
  %268 = vmatpush1.msra.mxu0 0.0
  %269 = vmatprep.subr.mxu0 0.0
  %270 = vmatpush1.msra.mxu0 0.0
  %271 = vmatprep.subr.mxu0 0.0
  %272 = vmatpush1.msra.mxu0 0.0
  %273 = vmatprep.subr.mxu0 0.0
  %274 = vmatpush1.msra.mxu0 0.0
  %275 = vmatprep.subr.mxu0 0.0
  %276 = vmatpush1.msra.mxu0 0.0
  %277 = vmatprep.subr.mxu0 0.0
  %278 = vmatpush1.msra.mxu0 0.0
  %279 = vmatprep.subr.mxu0 0.0
  %280 = vmatpush1.msra.mxu0 0.0
  %281 = vmatprep.subr.mxu0 0.0
  %282 = vmatpush1.msra.mxu0 0.0
  %283 = vmatprep.subr.mxu0 0.0
  %284 = vmatpush1.msra.mxu0 0.0
  %285 = vmatprep.subr.mxu0 0.0
  %286 = vmatpush1.msra.mxu0 0.0
  %287 = vmatprep.subr.mxu0 0.0
  %288 = vmatpush1.msra.mxu0 0.0
  %289 = vmatprep.subr.mxu0 0.0
  %290 = vmatpush1.msra.mxu0 0.0
  %291 = vmatprep.subr.mxu0 0.0
  %292 = vmatpush1.msra.mxu0 0.0
  %293 = vmatprep.subr.mxu0 0.0
  %294 = vmatpush1.msra.mxu0 0.0
  %295 = vmatprep.mubr.f32.mxu0 0.0
  %296 = vmatmul.mubr.f32.gmra.mrb[0].mxu0 %v150
  %v297 = vpop.f32.mrb[0].mxu0
  %v298 = vadd.f32 0.0, %v297
  %v299 = vpop.f32.mrb[0].mxu0
  %300 = vdwg.mxu0
  %v301 = vld [vmem:[%s4] sm:$0xff]
  %v302 = vld [vmem:[%s4 + $0x8] sm:$0xff]
  %v303 = vld [vmem:[%s4 + $0x10] sm:$0xff]
  %v304 = vld [vmem:[%s4 + $0x18] sm:$0x1]
  %vm305 = vcmask 203776
  %v307 = vsel %vm305, %v223, 0
  %v310 = vsel %vm69, %v304, 0
  %312 = vmatprep.subr.mxu0 0.0
  %313 = vmatpush1.msra.mxu0 %v301
  %314 = vmatprep.subr.mxu0 0.0
  %315 = vmatpush1.msra.mxu0 %v302
  %316 = vmatprep.subr.mxu0 0.0
  %317 = vmatpush1.msra.mxu0 %v303
  %318 = vmatprep.subr.mxu0 0.0
  %319 = vmatpush1.msra.mxu0 %v310
  %320 = vmatprep.subr.mxu0 0.0
  %321 = vmatpush1.msra.mxu0 0.0
  %322 = vmatprep.subr.mxu0 0.0
  %323 = vmatpush1.msra.mxu0 0.0
  %324 = vmatprep.subr.mxu0 0.0
  %325 = vmatpush1.msra.mxu0 0.0
  %326 = vmatprep.subr.mxu0 0.0
  %327 = vmatpush1.msra.mxu0 0.0
  %328 = vmatprep.subr.mxu0 0.0
  %329 = vmatpush1.msra.mxu0 0.0
  %330 = vmatprep.subr.mxu0 0.0
  %331 = vmatpush1.msra.mxu0 0.0
  %332 = vmatprep.subr.mxu0 0.0
  %333 = vmatpush1.msra.mxu0 0.0
  %334 = vmatprep.subr.mxu0 0.0
  %335 = vmatpush1.msra.mxu0 0.0
  %336 = vmatprep.subr.mxu0 0.0
  %337 = vmatpush1.msra.mxu0 0.0
  %338 = vmatprep.subr.mxu0 0.0
  %339 = vmatpush1.msra.mxu0 0.0
  %340 = vmatprep.subr.mxu0 0.0
  %341 = vmatpush1.msra.mxu0 0.0
  %342 = vmatprep.subr.mxu0 0.0
  %343 = vmatpush1.msra.mxu0 0.0
  %344 = vmatprep.subr.mxu0 0.0
  %345 = vmatpush1.msra.mxu0 0.0
  %346 = vmatprep.subr.mxu0 0.0
  %347 = vmatpush1.msra.mxu0 0.0
  %348 = vmatprep.subr.mxu0 0.0
  %349 = vmatpush1.msra.mxu0 0.0
  %350 = vmatprep.subr.mxu0 0.0
  %351 = vmatpush1.msra.mxu0 0.0
  %352 = vmatprep.subr.mxu0 0.0
  %353 = vmatpush1.msra.mxu0 0.0
  %354 = vmatprep.subr.mxu0 0.0
  %355 = vmatpush1.msra.mxu0 0.0
  %356 = vmatprep.subr.mxu0 0.0
  %357 = vmatpush1.msra.mxu0 0.0
  %358 = vmatprep.subr.mxu0 0.0
  %359 = vmatpush1.msra.mxu0 0.0
  %360 = vmatprep.subr.mxu0 0.0
  %361 = vmatpush1.msra.mxu0 0.0
  %362 = vmatprep.subr.mxu0 0.0
  %363 = vmatpush1.msra.mxu0 0.0
  %364 = vmatprep.subr.mxu0 0.0
  %365 = vmatpush1.msra.mxu0 0.0
  %366 = vmatprep.subr.mxu0 0.0
  %367 = vmatpush1.msra.mxu0 0.0
  %368 = vmatprep.subr.mxu0 0.0
  %369 = vmatpush1.msra.mxu0 0.0
  %370 = vmatprep.subr.mxu0 0.0
  %371 = vmatpush1.msra.mxu0 0.0
  %372 = vmatprep.subr.mxu0 0.0
  %373 = vmatpush1.msra.mxu0 0.0
  %374 = vmatprep.subr.mxu0 0.0
  %375 = vmatpush1.msra.mxu0 0.0
  %376 = vmatprep.mubr.f32.mxu0 0.0
  %377 = vmatmul.mubr.f32.gmra.mrb[0].mxu0 %v307
  %v378 = vpop.f32.mrb[0].mxu0
  %v379 = vadd.f32 0.0, %v378
  %v380 = vpop.f32.mrb[0].mxu0
  %381 = vdwg.mxu0
  %v382 = vmul.f32 %v379, 0.014285714
  %v384 = vsel %vm305, %v298, 0
  %386 = vmatprep.subr.mxu0 0.0
  %387 = vmatpush1.msra.mxu0 %v301
  %388 = vmatprep.subr.mxu0 0.0
  %389 = vmatpush1.msra.mxu0 %v302
  %390 = vmatprep.subr.mxu0 0.0
  %391 = vmatpush1.msra.mxu0 %v303
  %392 = vmatprep.subr.mxu0 0.0
  %393 = vmatpush1.msra.mxu0 %v310
  %394 = vmatprep.subr.mxu0 0.0
  %395 = vmatpush1.msra.mxu0 0.0
  %396 = vmatprep.subr.mxu0 0.0
  %397 = vmatpush1.msra.mxu0 0.0
  %398 = vmatprep.subr.mxu0 0.0
  %399 = vmatpush1.msra.mxu0 0.0
  %400 = vmatprep.subr.mxu0 0.0
  %401 = vmatpush1.msra.mxu0 0.0
  %402 = vmatprep.subr.mxu0 0.0
  %403 = vmatpush1.msra.mxu0 0.0
  %404 = vmatprep.subr.mxu0 0.0
  %405 = vmatpush1.msra.mxu0 0.0
  %406 = vmatprep.subr.mxu0 0.0
  %407 = vmatpush1.msra.mxu0 0.0
  %408 = vmatprep.subr.mxu0 0.0
  %409 = vmatpush1.msra.mxu0 0.0
  %410 = vmatprep.subr.mxu0 0.0
  %411 = vmatpush1.msra.mxu0 0.0
  %412 = vmatprep.subr.mxu0 0.0
  %413 = vmatpush1.msra.mxu0 0.0
  %414 = vmatprep.subr.mxu0 0.0
  %415 = vmatpush1.msra.mxu0 0.0
  %416 = vmatprep.subr.mxu0 0.0
  %417 = vmatpush1.msra.mxu0 0.0
  %418 = vmatprep.subr.mxu0 0.0
  %419 = vmatpush1.msra.mxu0 0.0
  %420 = vmatprep.subr.mxu0 0.0
  %421 = vmatpush1.msra.mxu0 0.0
  %422 = vmatprep.subr.mxu0 0.0
  %423 = vmatpush1.msra.mxu0 0.0
  %424 = vmatprep.subr.mxu0 0.0
  %425 = vmatpush1.msra.mxu0 0.0
  %426 = vmatprep.subr.mxu0 0.0
  %427 = vmatpush1.msra.mxu0 0.0
  %428 = vmatprep.subr.mxu0 0.0
  %429 = vmatpush1.msra.mxu0 0.0
  %430 = vmatprep.subr.mxu0 0.0
  %431 = vmatpush1.msra.mxu0 0.0
  %432 = vmatprep.subr.mxu0 0.0
  %433 = vmatpush1.msra.mxu0 0.0
  %434 = vmatprep.subr.mxu0 0.0
  %435 = vmatpush1.msra.mxu0 0.0
  %436 = vmatprep.subr.mxu0 0.0
  %437 = vmatpush1.msra.mxu0 0.0
  %438 = vmatprep.subr.mxu0 0.0
  %439 = vmatpush1.msra.mxu0 0.0
  %440 = vmatprep.subr.mxu0 0.0
  %441 = vmatpush1.msra.mxu0 0.0
  %442 = vmatprep.subr.mxu0 0.0
  %443 = vmatpush1.msra.mxu0 0.0
  %444 = vmatprep.subr.mxu0 0.0
  %445 = vmatpush1.msra.mxu0 0.0
  %446 = vmatprep.subr.mxu0 0.0
  %447 = vmatpush1.msra.mxu0 0.0
  %448 = vmatprep.subr.mxu0 0.0
  %449 = vmatpush1.msra.mxu0 0.0
  %450 = vmatprep.mubr.f32.mxu0 0.0
  %451 = vmatmul.mubr.f32.gmra.mrb[0].mxu0 %v384
  %v452 = vpop.f32.mrb[0].mxu0
  %v453 = vadd.f32 0.0, %v452
  %v454 = vpop.f32.mrb[0].mxu0
  %455 = vdwg.mxu0
  %v456 = vmul.f32 %v453, 0.014285714
  %v457 = vmul.f32 %v382, %v382
  %v458 = vsub.f32 %v456, %v457
  %v459 = vadd.f32 %v458, 1e-05
  %v460 = vrsqrt.pop %v459
  %v461 = vld [vmem:[%s2] sm:$0x1]
  %v462 = vmul.f32 %v461, %v460
  %v463 = vld [vmem:[%s3] sm:$0x1]
  %v464 = vmul.f32 %v382, %v462
  %v465 = vsub.f32 %v463, %v464
  %v466 = vld [vmem:[%s5] sm:$0x1f]
  %vm467 = vcmask 39936
  %v469 = vsel %vm467, %v462, 0
  %vm471 = vcmask 1044480
  %v473 = vsel %vm471, %v466, 0
  %475 = vmatprep.subr.mxu0 0.0
  %476 = vmatpush1.msra.mxu0 %v473
  %477 = vmatprep.subr.mxu0 0.0
  %478 = vmatpush1.msra.mxu0 0.0
  %479 = vmatprep.subr.mxu0 0.0
  %480 = vmatpush1.msra.mxu0 0.0
  %481 = vmatprep.subr.mxu0 0.0
  %482 = vmatpush1.msra.mxu0 0.0
  %483 = vmatprep.subr.mxu0 0.0
  %484 = vmatpush1.msra.mxu0 0.0
  %485 = vmatprep.subr.mxu0 0.0
  %486 = vmatpush1.msra.mxu0 0.0
  %487 = vmatprep.subr.mxu0 0.0
  %488 = vmatpush1.msra.mxu0 0.0
  %489 = vmatprep.subr.mxu0 0.0
  %490 = vmatpush1.msra.mxu0 0.0
  %491 = vmatprep.subr.mxu0 0.0
  %492 = vmatpush1.msra.mxu0 0.0
  %493 = vmatprep.subr.mxu0 0.0
  %494 = vmatpush1.msra.mxu0 0.0
  %495 = vmatprep.subr.mxu0 0.0
  %496 = vmatpush1.msra.mxu0 0.0
  %497 = vmatprep.subr.mxu0 0.0
  %498 = vmatpush1.msra.mxu0 0.0
  %499 = vmatprep.subr.mxu0 0.0
  %500 = vmatpush1.msra.mxu0 0.0
  %501 = vmatprep.subr.mxu0 0.0
  %502 = vmatpush1.msra.mxu0 0.0
  %503 = vmatprep.subr.mxu0 0.0
  %504 = vmatpush1.msra.mxu0 0.0
  %505 = vmatprep.subr.mxu0 0.0
  %506 = vmatpush1.msra.mxu0 0.0
  %507 = vmatprep.subr.mxu0 0.0
  %508 = vmatpush1.msra.mxu0 0.0
  %509 = vmatprep.subr.mxu0 0.0
  %510 = vmatpush1.msra.mxu0 0.0
  %511 = vmatprep.subr.mxu0 0.0
  %512 = vmatpush1.msra.mxu0 0.0
  %513 = vmatprep.subr.mxu0 0.0
  %514 = vmatpush1.msra.mxu0 0.0
  %515 = vmatprep.subr.mxu0 0.0
  %516 = vmatpush1.msra.mxu0 0.0
  %517 = vmatprep.subr.mxu0 0.0
  %518 = vmatpush1.msra.mxu0 0.0
  %519 = vmatprep.subr.mxu0 0.0
  %520 = vmatpush1.msra.mxu0 0.0
  %521 = vmatprep.subr.mxu0 0.0
  %522 = vmatpush1.msra.mxu0 0.0
  %523 = vmatprep.subr.mxu0 0.0
  %524 = vmatpush1.msra.mxu0 0.0
  %525 = vmatprep.subr.mxu0 0.0
  %526 = vmatpush1.msra.mxu0 0.0
  %527 = vmatprep.subr.mxu0 0.0
  %528 = vmatpush1.msra.mxu0 0.0
  %529 = vmatprep.subr.mxu0 0.0
  %530 = vmatpush1.msra.mxu0 0.0
  %531 = vmatprep.subr.mxu0 0.0
  %532 = vmatpush1.msra.mxu0 0.0
  %533 = vmatprep.subr.mxu0 0.0
  %534 = vmatpush1.msra.mxu0 0.0
  %535 = vmatprep.subr.mxu0 0.0
  %536 = vmatpush1.msra.mxu0 0.0
  %537 = vmatprep.subr.mxu0 0.0
  %538 = vmatpush1.msra.mxu0 0.0
  %539 = vmatprep.mubr.f32.mxu0 0.0
  %540 = vmatmul.mubr.f32.gmra.mrb[0].mxu0 %v469
  %v541 = vpop.f32.mrb[0].mxu0
  %v542 = vadd.f32 0.0, %v541
  %v543 = vpop.f32.mrb[0].mxu0
  %544 = vdwg.mxu0
  %v546 = vsel %vm467, %v465, 0
  %548 = vmatprep.subr.mxu0 0.0
  %549 = vmatpush1.msra.mxu0 %v473
  %550 = vmatprep.subr.mxu0 0.0
  %551 = vmatpush1.msra.mxu0 0.0
  %552 = vmatprep.subr.mxu0 0.0
  %553 = vmatpush1.msra.mxu0 0.0
  %554 = vmatprep.subr.mxu0 0.0
  %555 = vmatpush1.msra.mxu0 0.0
  %556 = vmatprep.subr.mxu0 0.0
  %557 = vmatpush1.msra.mxu0 0.0
  %558 = vmatprep.subr.mxu0 0.0
  %559 = vmatpush1.msra.mxu0 0.0
  %560 = vmatprep.subr.mxu0 0.0
  %561 = vmatpush1.msra.mxu0 0.0
  %562 = vmatprep.subr.mxu0 0.0
  %563 = vmatpush1.msra.mxu0 0.0
  %564 = vmatprep.subr.mxu0 0.0
  %565 = vmatpush1.msra.mxu0 0.0
  %566 = vmatprep.subr.mxu0 0.0
  %567 = vmatpush1.msra.mxu0 0.0
  %568 = vmatprep.subr.mxu0 0.0
  %569 = vmatpush1.msra.mxu0 0.0
  %570 = vmatprep.subr.mxu0 0.0
  %571 = vmatpush1.msra.mxu0 0.0
  %572 = vmatprep.subr.mxu0 0.0
  %573 = vmatpush1.msra.mxu0 0.0
  %574 = vmatprep.subr.mxu0 0.0
  %575 = vmatpush1.msra.mxu0 0.0
  %576 = vmatprep.subr.mxu0 0.0
  %577 = vmatpush1.msra.mxu0 0.0
  %578 = vmatprep.subr.mxu0 0.0
  %579 = vmatpush1.msra.mxu0 0.0
  %580 = vmatprep.subr.mxu0 0.0
  %581 = vmatpush1.msra.mxu0 0.0
  %582 = vmatprep.subr.mxu0 0.0
  %583 = vmatpush1.msra.mxu0 0.0
  %584 = vmatprep.subr.mxu0 0.0
  %585 = vmatpush1.msra.mxu0 0.0
  %586 = vmatprep.subr.mxu0 0.0
  %587 = vmatpush1.msra.mxu0 0.0
  %588 = vmatprep.subr.mxu0 0.0
  %589 = vmatpush1.msra.mxu0 0.0
  %590 = vmatprep.subr.mxu0 0.0
  %591 = vmatpush1.msra.mxu0 0.0
  %592 = vmatprep.subr.mxu0 0.0
  %593 = vmatpush1.msra.mxu0 0.0
  %594 = vmatprep.subr.mxu0 0.0
  %595 = vmatpush1.msra.mxu0 0.0
  %596 = vmatprep.subr.mxu0 0.0
  %597 = vmatpush1.msra.mxu0 0.0
  %598 = vmatprep.subr.mxu0 0.0
  %599 = vmatpush1.msra.mxu0 0.0
  %600 = vmatprep.subr.mxu0 0.0
  %601 = vmatpush1.msra.mxu0 0.0
  %602 = vmatprep.subr.mxu0 0.0
  %603 = vmatpush1.msra.mxu0 0.0
  %604 = vmatprep.subr.mxu0 0.0
  %605 = vmatpush1.msra.mxu0 0.0
  %606 = vmatprep.subr.mxu0 0.0
  %607 = vmatpush1.msra.mxu0 0.0
  %608 = vmatprep.subr.mxu0 0.0
  %609 = vmatpush1.msra.mxu0 0.0
  %610 = vmatprep.subr.mxu0 0.0
  %611 = vmatpush1.msra.mxu0 0.0
  %612 = vmatprep.mubr.f32.mxu0 0.0
  %613 = vmatmul.mubr.f32.gmra.mrb[0].mxu0 %v546
  %v614 = vpop.f32.mrb[0].mxu0
  %v615 = vadd.f32 0.0, %v614
  %v616 = vpop.f32.mrb[0].mxu0
  %617 = vdwg.mxu0
  %v618 = vlaneseq
  %v619 = vshrl.u32 %v618, 7
  %v620 = vsub.s32 0, %v619
  %v621 = vrot.slane %v542, %v620
  %v622 = vmul.f32 %v140, %v621
  %v623 = vmul.f32 %v145, %v621
  %v624 = vlaneseq
  %v625 = vshrl.u32 %v624, 7
  %v626 = vsub.s32 0, %v625
  %v627 = vrot.slane %v615, %v626
  %v628 = vadd.f32 %v622, %v627
  %v629 = vadd.f32 %v623, %v627
  %v630 = vld [vmem:[%s6] sm:$0xff]
  %v631 = vld [vmem:[%s6 + $0x8] sm:$0xff]
  %v632 = vld [vmem:[%s6 + $0x10] sm:$0xff]
  %v633 = vld [vmem:[%s6 + $0x18] sm:$0x1]
  %v634 = vld [vmem:[%s7] sm:$0x1]
  %v636 = vlaneseq
  %v637 = vshrl.u32 %v636, 7
  %v638 = vsub.s32 0, %v637
  %v639 = vrot.slane %v634, %v638
  %v642 = vsel %vm305, %v628, 0
  %v645 = vsel %vm305, %v629, 0
  %v648 = vsel %vm69, %v633, 0
  %650 = vmatprep.subr.mxu0 0.0
  %651 = vmatpush1.msra.mxu0 %v630
  %652 = vmatprep.subr.mxu0 0.0
  %653 = vmatpush1.msra.mxu0 %v631
  %654 = vmatprep.subr.mxu0 0.0
  %655 = vmatpush1.msra.mxu0 %v632
  %656 = vmatprep.subr.mxu0 0.0
  %657 = vmatpush1.msra.mxu0 %v648
  %658 = vmatprep.subr.mxu0 0.0
  %659 = vmatpush1.msra.mxu0 0.0
  %660 = vmatprep.subr.mxu0 0.0
  %661 = vmatpush1.msra.mxu0 0.0
  %662 = vmatprep.subr.mxu0 0.0
  %663 = vmatpush1.msra.mxu0 0.0
  %664 = vmatprep.subr.mxu0 0.0
  %665 = vmatpush1.msra.mxu0 0.0
  %666 = vmatprep.subr.mxu0 0.0
  %667 = vmatpush1.msra.mxu0 0.0
  %668 = vmatprep.subr.mxu0 0.0
  %669 = vmatpush1.msra.mxu0 0.0
  %670 = vmatprep.subr.mxu0 0.0
  %671 = vmatpush1.msra.mxu0 0.0
  %672 = vmatprep.subr.mxu0 0.0
  %673 = vmatpush1.msra.mxu0 0.0
  %674 = vmatprep.subr.mxu0 0.0
  %675 = vmatpush1.msra.mxu0 0.0
  %676 = vmatprep.subr.mxu0 0.0
  %677 = vmatpush1.msra.mxu0 0.0
  %678 = vmatprep.subr.mxu0 0.0
  %679 = vmatpush1.msra.mxu0 0.0
  %680 = vmatprep.subr.mxu0 0.0
  %681 = vmatpush1.msra.mxu0 0.0
  %682 = vmatprep.subr.mxu0 0.0
  %683 = vmatpush1.msra.mxu0 0.0
  %684 = vmatprep.subr.mxu0 0.0
  %685 = vmatpush1.msra.mxu0 0.0
  %686 = vmatprep.subr.mxu0 0.0
  %687 = vmatpush1.msra.mxu0 0.0
  %688 = vmatprep.subr.mxu0 0.0
  %689 = vmatpush1.msra.mxu0 0.0
  %690 = vmatprep.subr.mxu0 0.0
  %691 = vmatpush1.msra.mxu0 0.0
  %692 = vmatprep.subr.mxu0 0.0
  %693 = vmatpush1.msra.mxu0 0.0
  %694 = vmatprep.subr.mxu0 0.0
  %695 = vmatpush1.msra.mxu0 0.0
  %696 = vmatprep.subr.mxu0 0.0
  %697 = vmatpush1.msra.mxu0 0.0
  %698 = vmatprep.subr.mxu0 0.0
  %699 = vmatpush1.msra.mxu0 0.0
  %700 = vmatprep.subr.mxu0 0.0
  %701 = vmatpush1.msra.mxu0 0.0
  %702 = vmatprep.subr.mxu0 0.0
  %703 = vmatpush1.msra.mxu0 0.0
  %704 = vmatprep.subr.mxu0 0.0
  %705 = vmatpush1.msra.mxu0 0.0
  %706 = vmatprep.subr.mxu0 0.0
  %707 = vmatpush1.msra.mxu0 0.0
  %708 = vmatprep.subr.mxu0 0.0
  %709 = vmatpush1.msra.mxu0 0.0
  %710 = vmatprep.subr.mxu0 0.0
  %711 = vmatpush1.msra.mxu0 0.0
  %712 = vmatprep.subr.mxu0 0.0
  %713 = vmatpush1.msra.mxu0 0.0
  %714 = vmatprep.mubr.f32.mxu0 0.0
  %715 = vmatmul.mubr.f32.gmra.mrb[0].mxu0 %v642
  %v716 = vpop.f32.mrb[0].mxu0
  %v717 = vadd.f32 %v639, %v716
  %v718 = vpop.f32.mrb[0].mxu0
  %719 = vmatprep.mubr.f32.mxu0 0.0
  %720 = vmatmul.mubr.f32.gmra.mrb[0].mxu0 %v645
  %v721 = vpop.f32.mrb[0].mxu0
  %v722 = vadd.f32 %v639, %v721
  %v723 = vpop.f32.mrb[0].mxu0
  %724 = vdwg.mxu0
  %vm725 = vcmask 80896
  %726 = vst.msk [vmem:[%s8] sm:$0xff] %vm725, %v717
  %vm727 = vcmask 78848
  %728 = vst.msk [vmem:[%s8 + $0x8] sm:$0x3f] %vm727, %v722
  // Predicated region
  $region34: #{mynet_forward.1} parent=0 // pred_check
    _
  $region35: #{mynet_forward.1} parent=0 // pred_check_branch
    %730 = sbr.rel (0) target = $region37
  $region36: #{mynet_forward.1} parent=0 // pred_region
    _
  $region37: #{mynet_forward.1} parent=0 // pred_fallthru
    _
  // Predicated region
  $region38: #{mynet_forward.1} parent=0 // pred_check
    _
  $region39: #{mynet_forward.1} parent=0 // pred_check_branch
    %732 = sbr.rel (0) target = $region41
  $region40: #{mynet_forward.1} parent=0 // pred_region
    _
  $region41: #{mynet_forward.1} parent=0 // pred_fallthru
    _

</llo_original>
